<compile_context>
chip_gen: v7x
topology: tpu7x:2x2x1
jax: 0.10.0
libtpu: 0.0.40
codegen_flags: <defaults>
</compile_context>

<pallas_src>
import jax
import jax.numpy as jnp
from jax.experimental import pallas as pl
from jax.experimental.pallas import tpu as pltpu

_LANE_CANDIDATES = (1024, 512, 256, 128)   # lane-dense slab widths (multiples of 128)


def _quantize_kernel(real_ref, fake_ref, real_out_ref, fake_out_ref):
    """Elementwise: uint8(255 * (clamp(x,-1,1)*0.5 + 0.5)) for both inputs."""

    def q(x):
        x = x.astype(jnp.float32)                 # per-tile cast (free on VPU)
        x = jnp.clip(x, -1.0, 1.0)
        y = 255.0 * (x * 0.5 + 0.5)               # keep exact torch arithmetic form
        return y.astype(jnp.uint8)                # truncation == torch .to(uint8) here

    real_out_ref[...] = q(real_ref[...])
    fake_out_ref[...] = q(fake_ref[...])


def _quantize_jnp(x):
    """Same math as the kernel, as fused XLA ops (tiny-tail / tiny-input path)."""
    x = x.astype(jnp.float32)
    return (255.0 * (jnp.clip(x, -1.0, 1.0) * 0.5 + 0.5)).astype(jnp.uint8)


def _target_block_bytes():
    """Per-input block size in bytes.

    ~2 MiB already sits >85% of the HBM streaming roofline on v5e/v6e; on v7x a
    2 MiB block streams in ~1.6 us so the ~0.35 us per-step overhead is ~18% of
    the step -> use ~4 MiB there.
    """
    try:
        kind = jax.devices()[0].device_kind.lower()
    except Exception:  # pragma: no cover - defensive; default is fine everywhere
        kind = ""
    return (4 << 20) if "v7" in kind else (2 << 20)


def _pick_tile_rows(rows, lanes, itemsize, target_bytes):
    """Rows per block: byte-sized target, but never a 1-3 step grid."""
    if rows < 64:
        return rows                                   # full-array single block
    tile = max(32, (target_bytes // (lanes * itemsize)) // 32 * 32)
    # Keep >= min_steps grid steps so the DMA pipeline has depth and the
    # "parallel" axis splits roughly evenly across v7x's two TensorCores.
    if rows >= 8 * 32:
        min_steps = 8
    elif rows >= 4 * 32:
        min_steps = 4
    else:
        min_steps = 2
    tile = min(tile, max(32, (rows // min_steps) // 32 * 32))
    return tile


def image_quantize(real, fake, *, tile_rows=None, target_block_bytes=None):
    """Pallas version of the real/fake uint8 quantization in Image.forward."""
    assert real.shape == fake.shape, "real/fake must share a shape"
    orig_shape = real.shape
    total = real.size
    itemsize = jnp.dtype(real.dtype).itemsize

    bulk = (total // 128) * 128                       # largest lane-aligned prefix
    tail = total - bulk

    if bulk == 0:
        # Fewer than 128 elements: not worth a Pallas launch.
        return _quantize_jnp(real), _quantize_jnp(fake)

    lanes = 128
    for cand in _LANE_CANDIDATES:                     # widest lane width that fits
        if bulk % cand == 0:
            lanes = cand
            break
    rows = bulk // lanes

    if target_block_bytes is None:
        target_block_bytes = _target_block_bytes()
    if tile_rows is None:
        tile_rows = _pick_tile_rows(rows, lanes, itemsize, target_block_bytes)
    tile_rows = min(tile_rows, rows)

    grid = (pl.cdiv(rows, tile_rows),)                # ragged last block masked by Pallas
    block_spec = pl.BlockSpec((tile_rows, lanes), lambda i: (i, 0))

    # Explicit VMEM budget: 2 inputs x 2 bufs x in_block + 2 uint8 outputs x
    # 2 bufs x out_block, plus headroom.  Stays well under v7x's 64 MiB VMEM.
    in_block_bytes = tile_rows * lanes * itemsize
    out_block_bytes = tile_rows * lanes               # uint8
    vmem_limit = min(
        max(4 * in_block_bytes + 4 * out_block_bytes + (4 << 20), 16 << 20),
        48 << 20,
    )

    real_flat = real.reshape(-1)                      # native dtype, no upcast here
    fake_flat = fake.reshape(-1)
    # Bulk prefix goes through the Pallas kernel; the <128-element tail (only
    # for ragged totals) is quantized by plain jnp ops below — no full-array
    # jnp.pad copy of the f32 inputs.
    # TODO(synk): for ragged totals XLA may still materialize the prefix slice;
    #             a fully copy-free path would need native-shape or 1-D blocks.
    real_slab = real_flat[:bulk].reshape(rows, lanes)
    fake_slab = fake_flat[:bulk].reshape(rows, lanes)

    real_q_bulk, fake_q_bulk = pl.pallas_call(
        _quantize_kernel,
        grid=grid,
        out_shape=(
            jax.ShapeDtypeStruct((rows, lanes), jnp.uint8),
            jax.ShapeDtypeStruct((rows, lanes), jnp.uint8),
        ),
        in_specs=[block_spec, block_spec],
        out_specs=(block_spec, block_spec),
        compiler_params=pltpu.CompilerParams(
            dimension_semantics=("parallel",),
            vmem_limit_bytes=vmem_limit,
        ),
    )(real_slab, fake_slab)

    def assemble(bulk_q, flat_in):
        out = bulk_q.reshape(-1)
        if tail:
            out = jnp.concatenate([out, _quantize_jnp(flat_in[bulk:])])
        return out.reshape(orig_shape)

    return assemble(real_q_bulk, real_flat), assemble(fake_q_bulk, fake_flat)


def image_forward(real, fake):
    """Mirror of Image.forward with metrics disabled (default ctor flags)."""
    real_u8, fake_u8 = image_quantize(real, fake)
    metric_dict = {"ISC": [0, 0], "FID": [0, 0], "KID": [0, 0]}
    return metric_dict, real_u8, fake_u8


if __name__ == "__main__":
    key = jax.random.PRNGKey(0)
    k_real, k_fake = jax.random.split(key)

    def ref(x):
        x = x.astype(jnp.float32)
        return (255.0 * (jnp.clip(x, -1.0, 1.0) * 0.5 + 0.5)).astype(jnp.uint8)

    # --- Primary test: small image batch, NCHW like the PyTorch module. ---
    shape = (2, 3, 16, 16)
    real = jax.random.normal(k_real, shape, dtype=jnp.float32) * 1.5   # exercise clamp
    fake = jax.random.normal(k_fake, shape, dtype=jnp.float32) * 1.5

    metrics, real_u8, fake_u8 = image_forward(real, fake)
    jax.block_until_ready((real_u8, fake_u8))

    assert real_u8.dtype == jnp.uint8 and fake_u8.dtype == jnp.uint8
    assert real_u8.shape == shape and fake_u8.shape == shape
    assert jnp.array_equal(real_u8, ref(real))
    assert jnp.array_equal(fake_u8, ref(fake))
    assert metrics == {"ISC": [0, 0], "FID": [0, 0], "KID": [0, 0]}

    # --- Secondary test: multi-block grid with a ragged last slab block. ---
    shape2 = (2, 3, 40, 40)                      # total=9600 -> lanes=128, rows=75
    k2a, k2b = jax.random.split(jax.random.PRNGKey(1))
    real2 = jax.random.normal(k2a, shape2, dtype=jnp.float32) * 1.5
    fake2 = jax.random.normal(k2b, shape2, dtype=jnp.float32) * 1.5
    r2_u8, f2_u8 = image_quantize(real2, fake2)           # grid=3, ragged tail block
    jax.block_until_ready((r2_u8, f2_u8))
    assert jnp.array_equal(r2_u8, ref(real2))
    assert jnp.array_equal(f2_u8, ref(fake2))

    # --- Third test: ragged total (not divisible by 128) -> bulk + jnp tail. ---
    shape3 = (2, 3, 17, 17)                      # total=1734 -> bulk=1664, tail=70
    k3a, k3b = jax.random.split(jax.random.PRNGKey(2))
    real3 = jax.random.normal(k3a, shape3, dtype=jnp.float32) * 1.5
    fake3 = jax.random.normal(k3b, shape3, dtype=jnp.float32) * 1.5
    r3_u8, f3_u8 = image_quantize(real3, fake3)
    jax.block_until_ready((r3_u8, f3_u8))
    assert jnp.array_equal(r3_u8, ref(real3))
    assert jnp.array_equal(f3_u8, ref(fake3))

    # --- Fourth test: bf16 inputs exercise the byte-based (dtype-aware) sizing. ---
    shape4 = (2, 4, 16, 16)
    k4a, k4b = jax.random.split(jax.random.PRNGKey(3))
    real4 = (jax.random.normal(k4a, shape4, dtype=jnp.float32) * 1.5).astype(jnp.bfloat16)
    fake4 = (jax.random.normal(k4b, shape4, dtype=jnp.float32) * 1.5).astype(jnp.bfloat16)
    r4_u8, f4_u8 = image_quantize(real4, fake4)
    jax.block_until_ready((r4_u8, f4_u8))
    assert jnp.array_equal(r4_u8, ref(real4))
    assert jnp.array_equal(f4_u8, ref(fake4))

    print("KERNEL_OK")
</pallas_src>

<mosaic_0001>
module attributes {stable_mosaic.version = 11 : i64} {
  func.func @_quantize_kernel(%arg0: i32, %arg1: memref<3x512xf32, #tpu.memory_space<vmem>>, %arg2: memref<3x512xf32, #tpu.memory_space<vmem>>, %arg3: memref<3x512xi8, #tpu.memory_space<vmem>>, %arg4: memref<3x512xi8, #tpu.memory_space<vmem>>) attributes {dimension_semantics = [#tpu.dimension_semantics<parallel>], iteration_bounds = array<i64: 1>, scalar_prefetch = 0 : i64, scratch_operands = 0 : i64, tpu.core_type = #tpu.core_type<tc>, window_params = [{transform_indices = @transform_0, window_bounds = array<i64: 3, 512>}, {transform_indices = @transform_1, window_bounds = array<i64: 3, 512>}, {transform_indices = @transform_2, window_bounds = array<i64: 3, 512>}, {transform_indices = @transform_3, window_bounds = array<i64: 3, 512>}]} {
    %c0 = arith.constant 0 : index
    %c0_0 = arith.constant 0 : index
    %0 = vector.load %arg1[%c0, %c0_0] : memref<3x512xf32, #tpu.memory_space<vmem>>, vector<3x512xf32>
    %cst = arith.constant -1.000000e+00 : f32
    %cst_1 = arith.constant 1.000000e+00 : f32
    %1 = vector.broadcast %cst : f32 to vector<3x512xf32>
    %2 = arith.maximumf %1, %0 : vector<3x512xf32>
    %3 = vector.broadcast %cst_1 : f32 to vector<3x512xf32>
    %4 = arith.minimumf %3, %2 : vector<3x512xf32>
    %cst_2 = arith.constant 5.000000e-01 : f32
    %5 = vector.broadcast %cst_2 : f32 to vector<3x512xf32>
    %6 = arith.mulf %4, %5 : vector<3x512xf32>
    %cst_3 = arith.constant 5.000000e-01 : f32
    %7 = vector.broadcast %cst_3 : f32 to vector<3x512xf32>
    %8 = arith.addf %6, %7 : vector<3x512xf32>
    %cst_4 = arith.constant 2.550000e+02 : f32
    %9 = vector.broadcast %cst_4 : f32 to vector<3x512xf32>
    %10 = arith.mulf %9, %8 : vector<3x512xf32>
    %11 = arith.fptoui %10 : vector<3x512xf32> to vector<3x512xi8>
    %c0_5 = arith.constant 0 : index
    %c0_6 = arith.constant 0 : index
    %12 = vector.load %arg3[%c0_5, %c0_6] : memref<3x512xi8, #tpu.memory_space<vmem>>, vector<3x512xi8>
    tpu.vector_store %arg3[%c0_5, %c0_6], %11 {strides = array<i32>} : memref<3x512xi8, #tpu.memory_space<vmem>>, vector<3x512xi8>,
    %c0_7 = arith.constant 0 : index
    %c0_8 = arith.constant 0 : index
    %13 = vector.load %arg2[%c0_7, %c0_8] : memref<3x512xf32, #tpu.memory_space<vmem>>, vector<3x512xf32>
    %cst_9 = arith.constant -1.000000e+00 : f32
    %cst_10 = arith.constant 1.000000e+00 : f32
    %14 = vector.broadcast %cst_9 : f32 to vector<3x512xf32>
    %15 = arith.maximumf %14, %13 : vector<3x512xf32>
    %16 = vector.broadcast %cst_10 : f32 to vector<3x512xf32>
    %17 = arith.minimumf %16, %15 : vector<3x512xf32>
    %cst_11 = arith.constant 5.000000e-01 : f32
    %18 = vector.broadcast %cst_11 : f32 to vector<3x512xf32>
    %19 = arith.mulf %17, %18 : vector<3x512xf32>
    %cst_12 = arith.constant 5.000000e-01 : f32
    %20 = vector.broadcast %cst_12 : f32 to vector<3x512xf32>
    %21 = arith.addf %19, %20 : vector<3x512xf32>
    %cst_13 = arith.constant 2.550000e+02 : f32
    %22 = vector.broadcast %cst_13 : f32 to vector<3x512xf32>
    %23 = arith.mulf %22, %21 : vector<3x512xf32>
    %24 = arith.fptoui %23 : vector<3x512xf32> to vector<3x512xi8>
    %c0_14 = arith.constant 0 : index
    %c0_15 = arith.constant 0 : index
    %25 = vector.load %arg4[%c0_14, %c0_15] : memref<3x512xi8, #tpu.memory_space<vmem>>, vector<3x512xi8>
    tpu.vector_store %arg4[%c0_14, %c0_15], %24 {strides = array<i32>} : memref<3x512xi8, #tpu.memory_space<vmem>>, vector<3x512xi8>,
    return
  }
  func.func @transform_0(%arg0: i32) -> (i32, i32) {
    %c0_i32 = arith.constant 0 : i32
    %c0_i32_0 = arith.constant 0 : i32
    return %arg0, %c0_i32 : i32, i32
  }
  func.func @transform_1(%arg0: i32) -> (i32, i32) {
    %c0_i32 = arith.constant 0 : i32
    %c0_i32_0 = arith.constant 0 : i32
    return %arg0, %c0_i32 : i32, i32
  }
  func.func @transform_2(%arg0: i32) -> (i32, i32) {
    %c0_i32 = arith.constant 0 : i32
    %c0_i32_0 = arith.constant 0 : i32
    return %arg0, %c0_i32 : i32, i32
  }
  func.func @transform_3(%arg0: i32) -> (i32, i32) {
    %c0_i32 = arith.constant 0 : i32
    %c0_i32_0 = arith.constant 0 : i32
    return %arg0, %c0_i32 : i32, i32
  }
}

</mosaic_0001>

<llo_original>
// kernel: tpu_custom_call.1
$region0: #{tpu_custom_call.1}
  #allocation0 [shape = 'u32[]', space=smem, size = 0x4, offset = 0x4, fixed_abs, tag = 'smem constant byte address 0x4 - core index']
  #allocation1 [shape = 'u32[144,128]{1,0:T(1,128)}', space=vmem, size = 0x12000, scoped, tag = 'internal scratch']
  %s0 = inlined_call_operand.hbm [shape: f32[3,512], index: 0, kind: input, shape index: {}]
  %s1 = inlined_call_operand.hbm [shape: f32[3,512], index: 1, kind: input, shape index: {}]
  %s2 = inlined_call_operand.hbm [shape: u8[3,512], index: 2, kind: output, shape index: {0}]
  %s3 = inlined_call_operand.hbm [shape: u8[3,512], index: 3, kind: output, shape index: {1}]
  %4 = xla_tuple %s2, %s3
  %s5 = sld [smem:[#allocation0]]
  $region34: #{tpu_custom_call.1} parent=0
    _
  %s7 = ssub.s32 1, %s5
  %s8 = scalar_select 0, %s7, %s5
  $region1: #{tpu_custom_call.1} parent=0
    #allocation2 [shape = 'u8[8192]{0}', space=vmem, size = 0x2000, scoped, tag = 'input window, operand 0, single buffered']
    #allocation3 [shape = 's32[1]{0}', space=sflag, size = 0x4, scoped, tag = 'scoped memory for tpu_custom_call.1']
    #allocation4 [shape = 's32[1]{0}', space=sflag, size = 0x4, scoped, tag = 'scoped memory for tpu_custom_call.1']
    #allocation5 [shape = 'u8[8192]{0}', space=vmem, size = 0x2000, scoped, tag = 'input window, operand 1, single buffered']
    #allocation6 [shape = 's32[1]{0}', space=sflag, size = 0x4, scoped, tag = 'scoped memory for tpu_custom_call.1']
    #allocation7 [shape = 'u8[2048]{0}', space=vmem, size = 0x800, scoped, tag = 'output window, operand 0, single buffered']
    #allocation8 [shape = 'u8[2048]{0}', space=vmem, size = 0x800, scoped, tag = 'output window, operand 1, single buffered']
    #allocation9 [shape = 's32[1]{0}', space=sflag, size = 0x4, scoped, tag = 'scoped memory for tpu_custom_call.1']
    %9 = vsyncpa [#allocation3], 0
    %10 = vsyncpa [#allocation6], 0
    %11 = vsyncpa [#allocation4], 0
    %12 = vsyncpa [#allocation9], 0
    // Predicated region
    $region2: #{tpu_custom_call.1} parent=1 // pred_check
      _
    $region3: #{tpu_custom_call.1} parent=1 // pred_check_branch
      %14 = sbr.rel (0) target = $region5
    $region4: #{tpu_custom_call.1} parent=1 // pred_region
      %s16 = ssub.s32 256, 256
      %17 = vsyncadd [#allocation3], %s16
      %s19 = sshll.u32 [#allocation2], 4
      %s20 = int_to_ptr.vmem [resolvable:$true] %s19
      %22 = dma.hbm_to_vmem [thread:$0]  %s0, 256, %s20, [#allocation3]
    $region5: #{tpu_custom_call.1} parent=1 // pred_fallthru
      _
    // Predicated region
    $region6: #{tpu_custom_call.1} parent=1 // pred_check
      _
    $region7: #{tpu_custom_call.1} parent=1 // pred_check_branch
      %24 = sbr.rel (0) target = $region9
    $region8: #{tpu_custom_call.1} parent=1 // pred_region
      %s26 = ssub.s32 256, 256
      %27 = vsyncadd [#allocation6], %s26
      %s29 = sshll.u32 [#allocation5], 4
      %s30 = int_to_ptr.vmem [resolvable:$true] %s29
      %32 = dma.hbm_to_vmem [thread:$0]  %s1, 256, %s30, [#allocation6]
    $region9: #{tpu_custom_call.1} parent=1 // pred_fallthru
      _
    // Predicated region
    $region10: #{tpu_custom_call.1} parent=1 // pred_check
      _
    $region11: #{tpu_custom_call.1} parent=1 // pred_check_branch
      %34 = sbr.rel (0) target = $region13
    $region12: #{tpu_custom_call.1} parent=1 // pred_region
      %35 = dma.done [#allocation3], 256
    $region13: #{tpu_custom_call.1} parent=1 // pred_fallthru
      _
    // Predicated region
    $region14: #{tpu_custom_call.1} parent=1 // pred_check
      _
    $region15: #{tpu_custom_call.1} parent=1 // pred_check_branch
      %37 = sbr.rel (0) target = $region17
    $region16: #{tpu_custom_call.1} parent=1 // pred_region
      %38 = dma.done [#allocation6], 256
    $region17: #{tpu_custom_call.1} parent=1 // pred_fallthru
      _
    %v39 = vld [vmem:[#allocation2] sm:$0x77]
    %v40 = vld [vmem:[#allocation2 + $0x8] sm:$0x77]
    %v41 = vmax.f32 %v39, -1.0
    %v42 = vmax.f32 %v40, -1.0
    %v43 = vmin.f32 %v41, 1.0
    %v44 = vmin.f32 %v42, 1.0
    %v45 = vmul.f32 %v43, 0.5
    %v46 = vmul.f32 %v44, 0.5
    %v47 = vadd.f32 %v45, 0.5
    %v48 = vadd.f32 %v46, 0.5
    %v49 = vmul.f32 %v47, 255.0
    %v50 = vmul.f32 %v48, 255.0
    %v53 = vcombine.high %v49, %v49
    %v54 = vcombine.high %v50, %v50
    %v57 = vtrunc.f32 %v49
    %v58 = vtrunc.f32 %v53
    %v59 = vtrunc.f32 %v50
    %v60 = vtrunc.f32 %v54
    %v61 = vpack.c.f32.eXmY %v57, %v57, 56
    %v65 = vpack.c.b8 %v61, %v61
    %v67 = vpack.c.f32.eXmY %v58, %v58, 56
    %v71 = vpack.c.b8 %v67, %v67
    %v73 = vpack.c.f32.eXmY %v59, %v59, 56
    %v77 = vpack.c.b8 %v73, %v73
    %v79 = vpack.c.f32.eXmY %v60, %v60, 56
    %v83 = vpack.c.b8 %v79, %v79
    %v85 = vcombine.low %v65, %v71
    %v86 = vcombine.low %v77, %v83
    %v88 = vunpack.c.l.s4 1966171168
    %v89 = vunpack.c.0.s8 %v88
    %v90 = vlaneseq
    %v91 = vshrl.u32 %v90, 7
    %v92 = vsub.s32 %v89, %v91
    %v93 = vrot.slane %v85, %v92
    %v95 = vunpack.c.l.s4 1966171168
    %v96 = vunpack.c.0.s8 %v95
    %v97 = vlaneseq
    %v98 = vshrl.u32 %v97, 7
    %v99 = vsub.s32 %v96, %v98
    %v100 = vrot.slane %v86, %v99
    %v101 = vcombine.low %v93, %v100
    %v103 = vunpack.c.l.s4 1966171168
    %v104 = vunpack.c.0.s8 %v103
    %v105 = vlaneseq
    %v106 = vshrl.u32 %v105, 7
    %v107 = vsub.s32 %v104, %v106
    %v108 = vrot.slane %v101, %v107
    %vm109 = vcmask 1040384
    %vm110 = vsmask.f32 512
    %vm111 = vmand %vm109, %vm110
    %vm112 = vcmask 1041409
    %vm113 = vsmask.f32 1536
    %vm114 = vmand %vm112, %vm113
    %vm115 = vmor %vm114, %vm111
    %vm116 = vcmask 1042434
    %vm117 = vsmask.f32 2560
    %vm118 = vmand %vm116, %vm117
    %vm119 = vmor %vm118, %vm115
    %vm120 = vcmask 1043459
    %vm121 = vsmask.f32 3584
    %vm122 = vmand %vm120, %vm121
    %vm123 = vmor %vm122, %vm119
    %v124 = vld [vmem:[#allocation7] sm:$0xf]
    %v125 = vsel %vm123, %v108, %v124
    %126 = vst [vmem:[#allocation7] sm:$0xf] %v125
    %v127 = vld [vmem:[#allocation5] sm:$0x77]
    %v128 = vld [vmem:[#allocation5 + $0x8] sm:$0x77]
    %v129 = vmax.f32 %v127, -1.0
    %v130 = vmax.f32 %v128, -1.0
    %v131 = vmin.f32 %v129, 1.0
    %v132 = vmin.f32 %v130, 1.0
    %v133 = vmul.f32 %v131, 0.5
    %v134 = vmul.f32 %v132, 0.5
    %v135 = vadd.f32 %v133, 0.5
    %v136 = vadd.f32 %v134, 0.5
    %v137 = vmul.f32 %v135, 255.0
    %v138 = vmul.f32 %v136, 255.0
    %v141 = vcombine.high %v137, %v137
    %v142 = vcombine.high %v138, %v138
    %v145 = vtrunc.f32 %v137
    %v146 = vtrunc.f32 %v141
    %v147 = vtrunc.f32 %v138
    %v148 = vtrunc.f32 %v142
    %v149 = vpack.c.f32.eXmY %v145, %v145, 56
    %v153 = vpack.c.b8 %v149, %v149
    %v155 = vpack.c.f32.eXmY %v146, %v146, 56
    %v159 = vpack.c.b8 %v155, %v155
    %v161 = vpack.c.f32.eXmY %v147, %v147, 56
    %v165 = vpack.c.b8 %v161, %v161
    %v167 = vpack.c.f32.eXmY %v148, %v148, 56
    %v171 = vpack.c.b8 %v167, %v167
    %v173 = vcombine.low %v153, %v159
    %v174 = vcombine.low %v165, %v171
    %v176 = vunpack.c.l.s4 1966171168
    %v177 = vunpack.c.0.s8 %v176
    %v178 = vlaneseq
    %v179 = vshrl.u32 %v178, 7
    %v180 = vsub.s32 %v177, %v179
    %v181 = vrot.slane %v173, %v180
    %v183 = vunpack.c.l.s4 1966171168
    %v184 = vunpack.c.0.s8 %v183
    %v185 = vlaneseq
    %v186 = vshrl.u32 %v185, 7
    %v187 = vsub.s32 %v184, %v186
    %v188 = vrot.slane %v174, %v187
    %v189 = vcombine.low %v181, %v188
    %v191 = vunpack.c.l.s4 1966171168
    %v192 = vunpack.c.0.s8 %v191
    %v193 = vlaneseq
    %v194 = vshrl.u32 %v193, 7
    %v195 = vsub.s32 %v192, %v194
    %v196 = vrot.slane %v189, %v195
    %v197 = vld [vmem:[#allocation8] sm:$0xf]
    %v198 = vsel %vm123, %v196, %v197
    %199 = vst [vmem:[#allocation8] sm:$0xf] %v198
    // Predicated region
    $region18: #{tpu_custom_call.1} parent=1 // pred_check
      _
    $region19: #{tpu_custom_call.1} parent=1 // pred_check_branch
      %201 = sbr.rel (0) target = $region21
    $region20: #{tpu_custom_call.1} parent=1 // pred_region
      %s203 = ssub.s32 64, 64
      %204 = vsyncadd [#allocation4], %s203
      %s206 = sshll.u32 [#allocation7], 4
      %s207 = int_to_ptr.vmem [resolvable:$true] %s206
      %209 = dma.vmem_to_hbm [thread:$0]  %s207, 64, %s2, [#allocation4]
    $region21: #{tpu_custom_call.1} parent=1 // pred_fallthru
      _
    // Predicated region
    $region22: #{tpu_custom_call.1} parent=1 // pred_check
      _
    $region23: #{tpu_custom_call.1} parent=1 // pred_check_branch
      %211 = sbr.rel (0) target = $region25
    $region24: #{tpu_custom_call.1} parent=1 // pred_region
      %s213 = ssub.s32 64, 64
      %214 = vsyncadd [#allocation9], %s213
      %s216 = sshll.u32 [#allocation8], 4
      %s217 = int_to_ptr.vmem [resolvable:$true] %s216
      %219 = dma.vmem_to_hbm [thread:$0]  %s217, 64, %s3, [#allocation9]
    $region25: #{tpu_custom_call.1} parent=1 // pred_fallthru
      _
    // Predicated region
    $region26: #{tpu_custom_call.1} parent=1 // pred_check
      _
    $region27: #{tpu_custom_call.1} parent=1 // pred_check_branch
      %221 = sbr.rel (0) target = $region29
    $region28: #{tpu_custom_call.1} parent=1 // pred_region
      %222 = dma.done [#allocation4], 64
    $region29: #{tpu_custom_call.1} parent=1 // pred_fallthru
      _
    // Predicated region
    $region30: #{tpu_custom_call.1} parent=1 // pred_check
      _
    $region31: #{tpu_custom_call.1} parent=1 // pred_check_branch
      %224 = sbr.rel (0) target = $region33
    $region32: #{tpu_custom_call.1} parent=1 // pred_region
      %225 = dma.done [#allocation9], 64
    $region33: #{tpu_custom_call.1} parent=1 // pred_fallthru
      _
    %226 = vsyncpa [#allocation3], 1
    %227 = vsyncpa [#allocation6], 1
    %228 = vsyncpa [#allocation4], 1
    %229 = vsyncpa [#allocation9], 1

</llo_original>
